<compile_context>
chip_gen: v7x
topology: tpu7x:2x2x1
jax: 0.10.0
libtpu: 0.0.40
codegen_flags: <defaults>
</compile_context>

<pallas_src>
import math
import functools

import numpy as np
import jax
import jax.numpy as jnp
from jax.experimental import pallas as pl
from jax.experimental.pallas import tpu as pltpu


# ----------------------------------------------------------------------------
# Host-side parameter packing (one DMA for all weights/biases).
# Layout (rows x cols), cols = max(hidden, n_out):
#   rows [0, F)            cols [0, H) : W1^T   (in_features, hidden)
#   row  F                 cols [0, H) : b1
#   rows [F+1, F+1+H)      cols [0, O) : W2^T   (hidden, n_out)
#   row  F+1+H             cols [0, O) : b2
# ----------------------------------------------------------------------------
def pack_params(w1_t, b1, w2_t, b2):
    w1_t = np.asarray(w1_t, np.float32)
    b1 = np.asarray(b1, np.float32).reshape(-1)
    w2_t = np.asarray(w2_t, np.float32)
    b2 = np.asarray(b2, np.float32).reshape(-1)

    f, h = w1_t.shape
    h2, o = w2_t.shape
    assert h2 == h
    cols = max(h, o)
    rows = f + 1 + h + 1

    buf = np.zeros((rows, cols), np.float32)
    buf[0:f, 0:h] = w1_t
    buf[f, 0:h] = b1
    buf[f + 1:f + 1 + h, 0:o] = w2_t
    buf[f + 1 + h, 0:o] = b2
    return jnp.asarray(buf)


# ----------------------------------------------------------------------------
# Pallas kernel: relu(x @ W1^T + b1) @ W2^T + b2 -> log_softmax(dim=1)
# ----------------------------------------------------------------------------
def dressed_classical_kernel(x_ref, params_ref, o_ref, *, in_features, hidden, n_out):
    x = x_ref[...]                                              # (BT, F)
    p = params_ref[...]                                         # (F + H + 2, max(H, O))

    f, h, o = in_features, hidden, n_out
    w1 = p[0:f, 0:h]                                            # (F, H)
    b1 = p[f:f + 1, 0:h]                                        # (1, H)
    w2 = p[f + 1:f + 1 + h, 0:o]                                # (H, O)
    b2 = p[f + 1 + h:f + 2 + h, 0:o]                            # (1, O)

    # fc1 -> relu
    hact = jnp.maximum(
        jnp.dot(x, w1, preferred_element_type=jnp.float32) + b1, 0.0)   # (BT, H)

    # fc2
    logits = jnp.dot(hact, w2, preferred_element_type=jnp.float32) + b2  # (BT, O)

    if n_out == 2:
        # Explicit two-column log_softmax: pure VPU/EUP, no cross-lane reductions.
        l0 = logits[:, 0:1]
        l1 = logits[:, 1:2]
        m = jnp.maximum(l0, l1)
        lse = m + jnp.log(1.0 + jnp.exp(-jnp.abs(l0 - l1)))             # (BT, 1)
        o_ref[...] = logits - lse
    else:
        m = jnp.max(logits, axis=1, keepdims=True)
        z = logits - m
        lse = jnp.log(jnp.sum(jnp.exp(z), axis=1, keepdims=True))
        o_ref[...] = z - lse


def _pick_batch_tile(batch):
    """Largest batch tile <= 512 that evenly divides batch (multiple of 8 if tiled)."""
    if batch <= 512 or batch % 8 != 0:
        return batch
    bt = 512
    while batch % bt != 0:
        bt -= 8
    return bt


def dressed_classical_net(x, params_packed, *, in_features, hidden, n_out, bt=None):
    batch, f = x.shape
    assert f == in_features
    if bt is None:
        bt = _pick_batch_tile(batch)
    grid = (pl.cdiv(batch, bt),)

    kernel = functools.partial(
        dressed_classical_kernel,
        in_features=in_features, hidden=hidden, n_out=n_out)

    cost = pl.CostEstimate(
        flops=2 * batch * (in_features * hidden + hidden * n_out) + 8 * batch * n_out,
        transcendentals=2 * batch,  # exp + log per row in log_softmax
        bytes_accessed=(x.size + params_packed.size + batch * n_out) * 4,
    )

    return pl.pallas_call(
        kernel,
        grid=grid,
        in_specs=[
            pl.BlockSpec((bt, in_features), lambda i: (i, 0)),       # x tile, pipelined
            pl.BlockSpec(params_packed.shape, lambda i: (0, 0)),     # params stay resident
        ],
        out_specs=pl.BlockSpec((bt, n_out), lambda i: (i, 0)),
        out_shape=jax.ShapeDtypeStruct((batch, n_out), jnp.float32),
        compiler_params=pltpu.CompilerParams(dimension_semantics=("parallel",)),
        cost_estimate=cost,
    )(x, params_packed)


# ----------------------------------------------------------------------------
# Deterministic parameter initialization + run + reference check.
# ----------------------------------------------------------------------------
if __name__ == "__main__":
    input_shape = 16
    hidden = 4
    n_out = 2
    batch = 8

    key = jax.random.PRNGKey(0)
    k_w1, k_b1, k_w2, k_b2, k_x = jax.random.split(key, 5)

    # torch.nn.Linear default init: uniform(-1/sqrt(fan_in), 1/sqrt(fan_in))
    bound1 = 1.0 / math.sqrt(input_shape)
    w1_t = jax.random.uniform(k_w1, (input_shape, hidden), jnp.float32,
                              minval=-bound1, maxval=bound1)          # fc1.weight^T
    b1 = jax.random.uniform(k_b1, (hidden,), jnp.float32,
                            minval=-bound1, maxval=bound1)

    bound2 = 1.0 / math.sqrt(hidden)
    w2_t = jax.random.uniform(k_w2, (hidden, n_out), jnp.float32,
                              minval=-bound2, maxval=bound2)          # fc2.weight^T
    b2 = jax.random.uniform(k_b2, (n_out,), jnp.float32,
                            minval=-bound2, maxval=bound2)

    params_packed = pack_params(w1_t, b1, w2_t, b2)
    x = jax.random.normal(k_x, (batch, input_shape), jnp.float32)

    out = dressed_classical_net(x, params_packed,
                                in_features=input_shape, hidden=hidden, n_out=n_out)
    out = jax.block_until_ready(out)

    # Pure-JAX reference.
    ref_h = jnp.maximum(x @ w1_t + b1[None, :], 0.0)
    ref_logits = ref_h @ w2_t + b2[None, :]
    ref = ref_logits - jax.scipy.special.logsumexp(ref_logits, axis=1, keepdims=True)

    assert out.shape == (batch, n_out)
    assert bool(jnp.all(jnp.isfinite(out)))
    assert bool(jnp.allclose(out, ref, atol=1e-5, rtol=1e-5))
    # rows of log_softmax must exponentiate-sum to 1
    assert bool(jnp.allclose(jnp.sum(jnp.exp(out), axis=1), 1.0, atol=1e-5))

    print("KERNEL_OK")
</pallas_src>

<mosaic_0001>
module attributes {stable_mosaic.version = 11 : i64} {
  func.func @dressed_classical_kernel(%arg0: i32, %arg1: memref<8x16xf32, #tpu.memory_space<vmem>>, %arg2: memref<22x4xf32, #tpu.memory_space<vmem>>, %arg3: memref<8x2xf32, #tpu.memory_space<vmem>>) attributes {dimension_semantics = [#tpu.dimension_semantics<parallel>], iteration_bounds = array<i64: 1>, scalar_prefetch = 0 : i64, scratch_operands = 0 : i64, tpu.core_type = #tpu.core_type<tc>, window_params = [{transform_indices = @transform_0, window_bounds = array<i64: 8, 16>}, {pipeline_mode = #tpu.pipeline_mode<synchronous>, transform_indices = @transform_1, window_bounds = array<i64: 22, 4>}, {transform_indices = @transform_2, window_bounds = array<i64: 8, 2>}]} {
    %c0 = arith.constant 0 : index
    %c0_0 = arith.constant 0 : index
    %0 = vector.load %arg1[%c0, %c0_0] : memref<8x16xf32, #tpu.memory_space<vmem>>, vector<8x16xf32>
    %c0_1 = arith.constant 0 : index
    %c0_2 = arith.constant 0 : index
    %1 = vector.load %arg2[%c0_1, %c0_2] : memref<22x4xf32, #tpu.memory_space<vmem>>, vector<22x4xf32>
    %2 = vector.extract_strided_slice %1 {offsets = [0, 0], sizes = [16, 4], strides = [1, 1]} : vector<22x4xf32> to vector<16x4xf32>
    %3 = vector.extract_strided_slice %1 {offsets = [16, 0], sizes = [1, 4], strides = [1, 1]} : vector<22x4xf32> to vector<1x4xf32>
    %4 = vector.extract_strided_slice %1 {offsets = [17, 0], sizes = [4, 2], strides = [1, 1]} : vector<22x4xf32> to vector<4x2xf32>
    %5 = vector.extract_strided_slice %1 {offsets = [21, 0], sizes = [1, 2], strides = [1, 1]} : vector<22x4xf32> to vector<1x2xf32>
    %cst = arith.constant dense<0.000000e+00> : vector<8x4xf32>
    %6 = tpu.matmul %0, %2, %cst {dimension_numbers = #tpu.dot_dimension_numbers<[1], [0], [0], [1], [0, 0, 1, 1], [], []>} : vector<8x16xf32>, vector<16x4xf32>, vector<8x4xf32> -> vector<8x4xf32>
    %7 = vector.broadcast %3 : vector<1x4xf32> to vector<8x4xf32>
    %8 = arith.addf %6, %7 : vector<8x4xf32>
    %cst_3 = arith.constant 0.000000e+00 : f32
    %9 = vector.broadcast %cst_3 : f32 to vector<8x4xf32>
    %10 = arith.maximumf %8, %9 : vector<8x4xf32>
    %cst_4 = arith.constant dense<0.000000e+00> : vector<8x2xf32>
    %11 = tpu.matmul %10, %4, %cst_4 {dimension_numbers = #tpu.dot_dimension_numbers<[1], [0], [0], [1], [0, 0, 1, 1], [], []>} : vector<8x4xf32>, vector<4x2xf32>, vector<8x2xf32> -> vector<8x2xf32>
    %12 = vector.broadcast %5 : vector<1x2xf32> to vector<8x2xf32>
    %13 = arith.addf %11, %12 : vector<8x2xf32>
    %14 = vector.extract_strided_slice %13 {offsets = [0, 0], sizes = [8, 1], strides = [1, 1]} : vector<8x2xf32> to vector<8x1xf32>
    %15 = vector.extract_strided_slice %13 {offsets = [0, 1], sizes = [8, 1], strides = [1, 1]} : vector<8x2xf32> to vector<8x1xf32>
    %16 = arith.maximumf %14, %15 : vector<8x1xf32>
    %17 = arith.subf %14, %15 : vector<8x1xf32>
    %18 = math.absf %17 : vector<8x1xf32>
    %cst_5 = arith.constant 0.000000e+00 : f32
    %19 = vector.broadcast %cst_5 : f32 to vector<8x1xf32>
    %20 = arith.subf %19, %18 : vector<8x1xf32>
    %21 = math.exp %20 : vector<8x1xf32>
    %cst_6 = arith.constant 1.000000e+00 : f32
    %22 = vector.broadcast %cst_6 : f32 to vector<8x1xf32>
    %23 = arith.addf %22, %21 : vector<8x1xf32>
    %24 = math.log %23 : vector<8x1xf32>
    %25 = arith.addf %16, %24 : vector<8x1xf32>
    %26 = vector.broadcast %25 : vector<8x1xf32> to vector<8x2xf32>
    %27 = arith.subf %13, %26 : vector<8x2xf32>
    %c0_7 = arith.constant 0 : index
    %c0_8 = arith.constant 0 : index
    %28 = vector.load %arg3[%c0_7, %c0_8] : memref<8x2xf32, #tpu.memory_space<vmem>>, vector<8x2xf32>
    tpu.vector_store %arg3[%c0_7, %c0_8], %27 {strides = array<i32>} : memref<8x2xf32, #tpu.memory_space<vmem>>, vector<8x2xf32>,
    return
  }
  func.func @transform_0(%arg0: i32) -> (i32, i32) {
    %c0_i32 = arith.constant 0 : i32
    %c0_i32_0 = arith.constant 0 : i32
    return %arg0, %c0_i32 : i32, i32
  }
  func.func @transform_1(%arg0: i32) -> (i32, i32) {
    %c0_i32 = arith.constant 0 : i32
    %c0_i32_0 = arith.constant 0 : i32
    %c0_i32_1 = arith.constant 0 : i32
    return %c0_i32, %c0_i32_0 : i32, i32
  }
  func.func @transform_2(%arg0: i32) -> (i32, i32) {
    %c0_i32 = arith.constant 0 : i32
    %c0_i32_0 = arith.constant 0 : i32
    return %arg0, %c0_i32 : i32, i32
  }
}

</mosaic_0001>

<llo_original>
// kernel: tpu_custom_call.1
$region0: #{tpu_custom_call.1}
  #allocation0 [shape = 'u32[]', space=smem, size = 0x4, offset = 0x4, fixed_abs, tag = 'smem constant byte address 0x4 - core index']
  #allocation1 [shape = 'u32[144,128]{1,0:T(1,128)}', space=vmem, size = 0x12000, scoped, tag = 'internal scratch']
  %s0 = inlined_call_operand.vmem [shape: f32[8,16], index: 0, kind: input, shape index: {}]
  %s1 = inlined_call_operand.vmem [shape: f32[22,4], index: 1, kind: input, shape index: {}]
  %s2 = inlined_call_operand.vmem [shape: f32[8,2], index: 2, kind: output, shape index: {}]
  %s3 = sld [smem:[#allocation0]]
  $region18: #{tpu_custom_call.1} parent=0
    _
  %s5 = ssub.s32 1, %s3
  %s6 = scalar_select 0, %s5, %s3
  // Predicated region
  $region2: #{tpu_custom_call.1} parent=0 // pred_check
    _
  $region3: #{tpu_custom_call.1} parent=0 // pred_check_branch
    %8 = sbr.rel (0) target = $region5
  $region4: #{tpu_custom_call.1} parent=0 // pred_region
    _
  $region5: #{tpu_custom_call.1} parent=0 // pred_fallthru
    _
  // Predicated region
  $region6: #{tpu_custom_call.1} parent=0 // pred_check
    _
  $region7: #{tpu_custom_call.1} parent=0 // pred_check_branch
    %10 = sbr.rel (0) target = $region9
  $region8: #{tpu_custom_call.1} parent=0 // pred_region
    _
  $region9: #{tpu_custom_call.1} parent=0 // pred_fallthru
    _
  %v11 = vld [vmem:[%s0] sm:$0xff]
  %v12 = vld [vmem:[%s1] sm:$0xff]
  %v13 = vld [vmem:[%s1 + $0x8] sm:$0xff]
  %v14 = vld [vmem:[%s1 + $0x10] sm:$0x3f]
  %v15 = vlaneseq
  %v16 = vshrl.u32 %v15, 7
  %v17 = vsub.s32 0, %v16
  %v18 = vrot.slane %v14, %v17
  %vm19 = vcmask 130048
  %v21 = vsel %vm19, %v11, 0
  %23 = vmatprep.subr.mxu0 0.0
  %24 = vmatpush1.msra.mxu0 %v12
  %25 = vmatprep.subr.mxu0 0.0
  %26 = vmatpush1.msra.mxu0 %v13
  %27 = vmatprep.subr.mxu0 0.0
  %28 = vmatpush1.msra.mxu0 0.0
  %29 = vmatprep.subr.mxu0 0.0
  %30 = vmatpush1.msra.mxu0 0.0
  %31 = vmatprep.subr.mxu0 0.0
  %32 = vmatpush1.msra.mxu0 0.0
  %33 = vmatprep.subr.mxu0 0.0
  %34 = vmatpush1.msra.mxu0 0.0
  %35 = vmatprep.subr.mxu0 0.0
  %36 = vmatpush1.msra.mxu0 0.0
  %37 = vmatprep.subr.mxu0 0.0
  %38 = vmatpush1.msra.mxu0 0.0
  %39 = vmatprep.subr.mxu0 0.0
  %40 = vmatpush1.msra.mxu0 0.0
  %41 = vmatprep.subr.mxu0 0.0
  %42 = vmatpush1.msra.mxu0 0.0
  %43 = vmatprep.subr.mxu0 0.0
  %44 = vmatpush1.msra.mxu0 0.0
  %45 = vmatprep.subr.mxu0 0.0
  %46 = vmatpush1.msra.mxu0 0.0
  %47 = vmatprep.subr.mxu0 0.0
  %48 = vmatpush1.msra.mxu0 0.0
  %49 = vmatprep.subr.mxu0 0.0
  %50 = vmatpush1.msra.mxu0 0.0
  %51 = vmatprep.subr.mxu0 0.0
  %52 = vmatpush1.msra.mxu0 0.0
  %53 = vmatprep.subr.mxu0 0.0
  %54 = vmatpush1.msra.mxu0 0.0
  %55 = vmatprep.subr.mxu0 0.0
  %56 = vmatpush1.msra.mxu0 0.0
  %57 = vmatprep.subr.mxu0 0.0
  %58 = vmatpush1.msra.mxu0 0.0
  %59 = vmatprep.subr.mxu0 0.0
  %60 = vmatpush1.msra.mxu0 0.0
  %61 = vmatprep.subr.mxu0 0.0
  %62 = vmatpush1.msra.mxu0 0.0
  %63 = vmatprep.subr.mxu0 0.0
  %64 = vmatpush1.msra.mxu0 0.0
  %65 = vmatprep.subr.mxu0 0.0
  %66 = vmatpush1.msra.mxu0 0.0
  %67 = vmatprep.subr.mxu0 0.0
  %68 = vmatpush1.msra.mxu0 0.0
  %69 = vmatprep.subr.mxu0 0.0
  %70 = vmatpush1.msra.mxu0 0.0
  %71 = vmatprep.subr.mxu0 0.0
  %72 = vmatpush1.msra.mxu0 0.0
  %73 = vmatprep.subr.mxu0 0.0
  %74 = vmatpush1.msra.mxu0 0.0
  %75 = vmatprep.subr.mxu0 0.0
  %76 = vmatpush1.msra.mxu0 0.0
  %77 = vmatprep.subr.mxu0 0.0
  %78 = vmatpush1.msra.mxu0 0.0
  %79 = vmatprep.subr.mxu0 0.0
  %80 = vmatpush1.msra.mxu0 0.0
  %81 = vmatprep.subr.mxu0 0.0
  %82 = vmatpush1.msra.mxu0 0.0
  %83 = vmatprep.subr.mxu0 0.0
  %84 = vmatpush1.msra.mxu0 0.0
  %85 = vmatprep.subr.mxu0 0.0
  %86 = vmatpush1.msra.mxu0 0.0
  %87 = vmatprep.mubr.f32.mxu0 0.0
  %88 = vmatmul.mubr.f32.gmra.mrb[0].mxu0 %v21
  %v89 = vpop.f32.mrb[0].mxu0
  %v90 = vadd.f32 %v18, %v89
  %v91 = vpop.f32.mrb[0].mxu0
  %92 = vdwg.mxu0
  %v93 = vmax.f32 %v90, 0.0
  %v94 = vlaneseq
  %v95 = vshrl.u32 %v94, 7
  %v96 = vsub.s32 5, %v95
  %v97 = vrot.slane %v14, %v96
  %v99 = vrot.slane %v14, 1
  %vm100 = vcmask 31744
  %v102 = vsel %vm100, %v93, 0
  %vm104 = vcmask 1043456
  %v105 = vsel %vm104, %v99, 0
  %107 = vmatprep.subr.mxu0 0.0
  %108 = vmatpush1.msra.mxu0 %v105
  %109 = vmatprep.subr.mxu0 0.0
  %110 = vmatpush1.msra.mxu0 0.0
  %111 = vmatprep.subr.mxu0 0.0
  %112 = vmatpush1.msra.mxu0 0.0
  %113 = vmatprep.subr.mxu0 0.0
  %114 = vmatpush1.msra.mxu0 0.0
  %115 = vmatprep.subr.mxu0 0.0
  %116 = vmatpush1.msra.mxu0 0.0
  %117 = vmatprep.subr.mxu0 0.0
  %118 = vmatpush1.msra.mxu0 0.0
  %119 = vmatprep.subr.mxu0 0.0
  %120 = vmatpush1.msra.mxu0 0.0
  %121 = vmatprep.subr.mxu0 0.0
  %122 = vmatpush1.msra.mxu0 0.0
  %123 = vmatprep.subr.mxu0 0.0
  %124 = vmatpush1.msra.mxu0 0.0
  %125 = vmatprep.subr.mxu0 0.0
  %126 = vmatpush1.msra.mxu0 0.0
  %127 = vmatprep.subr.mxu0 0.0
  %128 = vmatpush1.msra.mxu0 0.0
  %129 = vmatprep.subr.mxu0 0.0
  %130 = vmatpush1.msra.mxu0 0.0
  %131 = vmatprep.subr.mxu0 0.0
  %132 = vmatpush1.msra.mxu0 0.0
  %133 = vmatprep.subr.mxu0 0.0
  %134 = vmatpush1.msra.mxu0 0.0
  %135 = vmatprep.subr.mxu0 0.0
  %136 = vmatpush1.msra.mxu0 0.0
  %137 = vmatprep.subr.mxu0 0.0
  %138 = vmatpush1.msra.mxu0 0.0
  %139 = vmatprep.subr.mxu0 0.0
  %140 = vmatpush1.msra.mxu0 0.0
  %141 = vmatprep.subr.mxu0 0.0
  %142 = vmatpush1.msra.mxu0 0.0
  %143 = vmatprep.subr.mxu0 0.0
  %144 = vmatpush1.msra.mxu0 0.0
  %145 = vmatprep.subr.mxu0 0.0
  %146 = vmatpush1.msra.mxu0 0.0
  %147 = vmatprep.subr.mxu0 0.0
  %148 = vmatpush1.msra.mxu0 0.0
  %149 = vmatprep.subr.mxu0 0.0
  %150 = vmatpush1.msra.mxu0 0.0
  %151 = vmatprep.subr.mxu0 0.0
  %152 = vmatpush1.msra.mxu0 0.0
  %153 = vmatprep.subr.mxu0 0.0
  %154 = vmatpush1.msra.mxu0 0.0
  %155 = vmatprep.subr.mxu0 0.0
  %156 = vmatpush1.msra.mxu0 0.0
  %157 = vmatprep.subr.mxu0 0.0
  %158 = vmatpush1.msra.mxu0 0.0
  %159 = vmatprep.subr.mxu0 0.0
  %160 = vmatpush1.msra.mxu0 0.0
  %161 = vmatprep.subr.mxu0 0.0
  %162 = vmatpush1.msra.mxu0 0.0
  %163 = vmatprep.subr.mxu0 0.0
  %164 = vmatpush1.msra.mxu0 0.0
  %165 = vmatprep.subr.mxu0 0.0
  %166 = vmatpush1.msra.mxu0 0.0
  %167 = vmatprep.subr.mxu0 0.0
  %168 = vmatpush1.msra.mxu0 0.0
  %169 = vmatprep.subr.mxu0 0.0
  %170 = vmatpush1.msra.mxu0 0.0
  %171 = vmatprep.mubr.f32.mxu0 0.0
  %172 = vmatmul.mubr.f32.gmra.mrb[0].mxu0 %v102
  %v173 = vpop.f32.mrb[0].mxu0
  %v174 = vadd.f32 %v97, %v173
  %v175 = vpop.f32.mrb[0].mxu0
  %176 = vdwg.mxu0
  %178 = vrot.lane.b32.xlu0 %v174, 127
  %v179 = vpop.permute.xlu0 %178
  %v181 = vmax.f32 %v174, %v179
  %v182 = vsub.f32 %v174, %v179
  %v183 = vand.u32 2147483647, %v182
  %v184 = vsub.f32 0.0, %v183
  %v185 = vmul.f32 %v184, 1.442695
  %v186 = vpow.pop %v185
  %v187 = vadd.f32 %v186, 1.0
  %v188 = vlog2.pop %v187
  %v189 = vmul.f32 %v188, 0.6931472
  %v190 = vadd.f32 %v181, %v189
  %192 = vset.pattern.permute.xlu0 0
  %193 = vperm.xlu0 %192, %v190
  %v194 = vpop.permute.xlu0 %193
  %v196 = vsub.f32 %v174, %v194
  %vm197 = vcmask 15360
  %198 = vst.msk [vmem:[%s2] sm:$0xff] %vm197, %v196
  // Predicated region
  $region10: #{tpu_custom_call.1} parent=0 // pred_check
    _
  $region11: #{tpu_custom_call.1} parent=0 // pred_check_branch
    %200 = sbr.rel (0) target = $region13
  $region12: #{tpu_custom_call.1} parent=0 // pred_region
    _
  $region13: #{tpu_custom_call.1} parent=0 // pred_fallthru
    _
  // Predicated region
  $region14: #{tpu_custom_call.1} parent=0 // pred_check
    _
  $region15: #{tpu_custom_call.1} parent=0 // pred_check_branch
    %202 = sbr.rel (0) target = $region17
  $region16: #{tpu_custom_call.1} parent=0 // pred_region
    _
  $region17: #{tpu_custom_call.1} parent=0 // pred_fallthru
    _

</llo_original>
